<compile_context>
chip_gen: v6e
topology: v6e:2x2x1
jax: 0.10.0
libtpu: 0.0.40
codegen_flags: <defaults>
</compile_context>

<pallas_src>
import jax
import jax.numpy as jnp
from jax.experimental import pallas as pl
from jax.experimental.pallas import tpu as pltpu

_LANES = 128
_SUBLANES = 8
_TILE_ELEMS = _SUBLANES * _LANES  # 1024


def _mish_kernel(x_ref, o_ref):
    x = x_ref[...].astype(jnp.float32)
    # mish(x) = x * tanh(softplus(x)) = x * t / (t + 2),  t = e^x * (e^x + 2)
    e = jnp.exp(jnp.minimum(x, 20.0))        # clamp -> no f32 overflow
    t = e * (e + 2.0)
    d = t + 2.0
    r = pl.reciprocal(d, approx=True)        # EUP vrcp (separate slot)
    r = r * (2.0 - d * r)                    # one Newton step -> full f32 precision
    y = x * t * r
    # for x > 20, tanh(softplus(x)) == 1 to f32 precision -> mish(x) == x
    y = jnp.where(x > 20.0, x, y)
    o_ref[...] = y.astype(o_ref.dtype)


def mish(x, *, tile_rows=4096):
    """Elementwise Mish on an arbitrary-shaped array via a Pallas TPU kernel."""
    orig_shape = x.shape
    orig_dtype = x.dtype
    n = x.size

    flat = jnp.ravel(x)
    rem = n % _TILE_ELEMS
    if rem != 0:
        # Slow path (rare for conv activations): pad up to (8*128) alignment.
        flat = jnp.pad(flat, (0, _TILE_ELEMS - rem))
    rows = flat.shape[0] // _LANES           # always a multiple of 8
    x2d = flat.reshape(rows, _LANES)

    if rows <= tile_rows:
        tr = rows                            # full extent: always a legal block
    else:
        tr = tile_rows                       # multiple of 32 -> ok for f32/bf16/i8
    grid = (pl.cdiv(rows, tr),)              # ragged last block is masked by Pallas

    out2d = pl.pallas_call(
        _mish_kernel,
        out_shape=jax.ShapeDtypeStruct((rows, _LANES), orig_dtype),
        grid_spec=pltpu.PrefetchScalarGridSpec(
            num_scalar_prefetch=0,
            grid=grid,
            in_specs=[pl.BlockSpec((tr, _LANES), lambda i: (i, 0))],
            out_specs=pl.BlockSpec((tr, _LANES), lambda i: (i, 0)),
        ),
        compiler_params=pltpu.CompilerParams(
            # required so the grid shards across v7x's 2 TensorCores;
            # no-op on single-TC v5e/v6e.
            dimension_semantics=("parallel",),
        ),
    )(x2d)

    out_flat = out2d.reshape(-1)
    if rem != 0:
        out_flat = out_flat[:n]
    return out_flat.reshape(orig_shape)


def _mish_ref(x):
    xf = x.astype(jnp.float32)
    # numerically-stable softplus: max(x, 0) + log1p(exp(-|x|))
    sp = jnp.maximum(xf, 0.0) + jnp.log1p(jnp.exp(-jnp.abs(xf)))
    return (xf * jnp.tanh(sp)).astype(x.dtype)


if __name__ == "__main__":
    key = jax.random.PRNGKey(0)

    # NCHW input, consistent with PyTorch conv-style activations (fast path).
    x = jax.random.normal(key, (2, 4, 16, 16), dtype=jnp.float32) * 3.0
    y = jax.block_until_ready(mish(x))
    y_ref = _mish_ref(x)
    assert y.shape == x.shape and y.dtype == x.dtype
    assert jnp.allclose(y, y_ref, atol=1e-5, rtol=1e-4)

    # Ragged size (exercises the padded fall-back path).
    x2 = jax.random.normal(jax.random.PRNGKey(1), (3, 5, 7), dtype=jnp.float32) * 4.0
    y2 = jax.block_until_ready(mish(x2))
    assert y2.shape == x2.shape and y2.dtype == x2.dtype
    assert jnp.allclose(y2, _mish_ref(x2), atol=1e-5, rtol=1e-4)

    print("KERNEL_OK")
</pallas_src>

<mosaic_0001>
module attributes {stable_mosaic.version = 11 : i64} {
  func.func @_mish_kernel(%arg0: i32, %arg1: memref<16x128xf32, #tpu.memory_space<vmem>>, %arg2: memref<16x128xf32, #tpu.memory_space<vmem>>) attributes {dimension_semantics = [#tpu.dimension_semantics<parallel>], iteration_bounds = array<i64: 1>, scalar_prefetch = 0 : i64, scratch_operands = 0 : i64, tpu.core_type = #tpu.core_type<tc>, window_params = [{transform_indices = @transform_0, window_bounds = array<i64: 16, 128>}, {transform_indices = @transform_1, window_bounds = array<i64: 16, 128>}]} {
    %c0 = arith.constant 0 : index
    %c0_0 = arith.constant 0 : index
    %0 = vector.load %arg1[%c0, %c0_0] : memref<16x128xf32, #tpu.memory_space<vmem>>, vector<16x128xf32>
    %cst = arith.constant 2.000000e+01 : f32
    %1 = vector.broadcast %cst : f32 to vector<16x128xf32>
    %2 = arith.minimumf %0, %1 : vector<16x128xf32>
    %3 = math.exp %2 : vector<16x128xf32>
    %cst_1 = arith.constant 2.000000e+00 : f32
    %4 = vector.broadcast %cst_1 : f32 to vector<16x128xf32>
    %5 = arith.addf %3, %4 : vector<16x128xf32>
    %6 = arith.mulf %3, %5 : vector<16x128xf32>
    %cst_2 = arith.constant 2.000000e+00 : f32
    %7 = vector.broadcast %cst_2 : f32 to vector<16x128xf32>
    %8 = arith.addf %6, %7 : vector<16x128xf32>
    %9 = tpu.reciprocal %8 {approx = true} : vector<16x128xf32> -> vector<16x128xf32>
    %10 = arith.mulf %8, %9 : vector<16x128xf32>
    %cst_3 = arith.constant 2.000000e+00 : f32
    %11 = vector.broadcast %cst_3 : f32 to vector<16x128xf32>
    %12 = arith.subf %11, %10 : vector<16x128xf32>
    %13 = arith.mulf %9, %12 : vector<16x128xf32>
    %14 = arith.mulf %0, %6 : vector<16x128xf32>
    %15 = arith.mulf %14, %13 : vector<16x128xf32>
    %cst_4 = arith.constant 2.000000e+01 : f32
    %16 = vector.broadcast %cst_4 : f32 to vector<16x128xf32>
    %17 = arith.cmpf ogt, %0, %16 : vector<16x128xf32>
    %18 = arith.select %17, %0, %15 : vector<16x128xi1>, vector<16x128xf32>
    %c0_5 = arith.constant 0 : index
    %c0_6 = arith.constant 0 : index
    %19 = vector.load %arg2[%c0_5, %c0_6] : memref<16x128xf32, #tpu.memory_space<vmem>>, vector<16x128xf32>
    tpu.vector_store %arg2[%c0_5, %c0_6], %18 {strides = array<i32>} : memref<16x128xf32, #tpu.memory_space<vmem>>, vector<16x128xf32>,
    return
  }
  func.func @transform_0(%arg0: i32) -> (i32, i32) {
    %c0_i32 = arith.constant 0 : i32
    %c0_i32_0 = arith.constant 0 : i32
    return %arg0, %c0_i32 : i32, i32
  }
  func.func @transform_1(%arg0: i32) -> (i32, i32) {
    %c0_i32 = arith.constant 0 : i32
    %c0_i32_0 = arith.constant 0 : i32
    return %arg0, %c0_i32 : i32, i32
  }
}

</mosaic_0001>

<llo_original>
// kernel: tpu_custom_call.1
$region0: #{tpu_custom_call.1}
  #allocation0 [shape = 'u32[]', space=smem, size = 0x4, offset = 0x4, fixed_abs, tag = 'smem constant byte address 0x4 - core index']
  #allocation1 [shape = 'u32[144,128]{1,0:T(1,128)}', space=vmem, size = 0x12000, scoped, tag = 'internal scratch']
  %s0 = inlined_call_operand.hbm [shape: f32[16,128], index: 0, kind: input, shape index: {}]
  %s1 = inlined_call_operand.hbm [shape: f32[16,128], index: 1, kind: output, shape index: {}]
  %s2 = sld [smem:[#allocation0]]
  $region18: #{tpu_custom_call.1} parent=0
    _
  %s4 = ssub.s32 1, %s2
  %s5 = scalar_select 0, %s4, %s2
  $region1: #{tpu_custom_call.1} parent=0
    #allocation2 [shape = 'u8[8192]{0}', space=vmem, size = 0x2000, scoped, tag = 'input window, operand 0, single buffered']
    #allocation3 [shape = 's32[1]{0}', space=sflag, size = 0x4, scoped, tag = 'scoped memory for tpu_custom_call.1']
    #allocation4 [shape = 's32[1]{0}', space=sflag, size = 0x4, scoped, tag = 'scoped memory for tpu_custom_call.1']
    #allocation5 [shape = 'u8[8192]{0}', space=vmem, size = 0x2000, scoped, tag = 'output window, operand 0, single buffered']
    %6 = vsyncpa [#allocation3], 0
    %7 = vsyncpa [#allocation4], 0
    // Predicated region
    $region2: #{tpu_custom_call.1} parent=1 // pred_check
      _
    $region3: #{tpu_custom_call.1} parent=1 // pred_check_branch
      %9 = sbr.rel (0) target = $region5
    $region4: #{tpu_custom_call.1} parent=1 // pred_region
      %s11 = ssub.s32 256, 256
      %12 = vsyncadd [#allocation3], %s11
      %s13 = sshll.u32 [#allocation2], 4
      %s14 = int_to_ptr.vmem [resolvable:$true] %s13
      %19 = dma.hbm_to_vmem [thread:$0]  %s0, 256, %s14, [#allocation3], 128, 128, 8
    $region5: #{tpu_custom_call.1} parent=1 // pred_fallthru
      _
    // Predicated region
    $region6: #{tpu_custom_call.1} parent=1 // pred_check
      _
    $region7: #{tpu_custom_call.1} parent=1 // pred_check_branch
      %21 = sbr.rel (0) target = $region9
    $region8: #{tpu_custom_call.1} parent=1 // pred_region
      %22 = dma.done [#allocation3], 256
    $region9: #{tpu_custom_call.1} parent=1 // pred_fallthru
      _
    %v23 = vld [vmem:[#allocation2] sm:$0xff]
    %v24 = vld [vmem:[#allocation2 + $0x8] sm:$0xff]
    %v25 = vmin.f32 %v23, 20.0
    %v26 = vmin.f32 %v24, 20.0
    %v27 = vmul.f32 %v25, 1.442695
    %v28 = vpow.pop %v27
    %v29 = vmul.f32 %v26, 1.442695
    %v30 = vpow.pop %v29
    %v31 = vadd.f32 %v28, 2.0
    %v32 = vadd.f32 %v30, 2.0
    %v33 = vmul.f32 %v28, %v31
    %v34 = vmul.f32 %v30, %v32
    %v35 = vadd.f32 %v33, 2.0
    %v36 = vadd.f32 %v34, 2.0
    %v37 = vrcp.pop %v35
    %v38 = vrcp.pop %v36
    %v39 = vmul.f32 %v35, %v37
    %v40 = vmul.f32 %v36, %v38
    %v41 = vsub.f32 2.0, %v39
    %v42 = vsub.f32 2.0, %v40
    %v43 = vmul.f32 %v37, %v41
    %v44 = vmul.f32 %v38, %v42
    %v45 = vmul.f32 %v23, %v33
    %v46 = vmul.f32 %v24, %v34
    %v47 = vmul.f32 %v45, %v43
    %v48 = vmul.f32 %v46, %v44
    %vm49 = vcmp.gt.f32.partialorder %v23, 20.0
    %vm50 = vcmp.gt.f32.partialorder %v24, 20.0
    %v51 = vsel %vm49, %v23, %v47
    %v52 = vsel %vm50, %v24, %v48
    %53 = vst [vmem:[#allocation5] sm:$0xff] %v51
    %54 = vst [vmem:[#allocation5 + $0x8] sm:$0xff] %v52
    // Predicated region
    $region10: #{tpu_custom_call.1} parent=1 // pred_check
      _
    $region11: #{tpu_custom_call.1} parent=1 // pred_check_branch
      %56 = sbr.rel (0) target = $region13
    $region12: #{tpu_custom_call.1} parent=1 // pred_region
      %s58 = ssub.s32 256, 256
      %59 = vsyncadd [#allocation4], %s58
      %s60 = sshll.u32 [#allocation5], 4
      %s61 = int_to_ptr.vmem [resolvable:$true] %s60
      %66 = dma.vmem_to_hbm [thread:$0]  %s61, 256, %s1, [#allocation4], 128, 128, 8
    $region13: #{tpu_custom_call.1} parent=1 // pred_fallthru
      _
    // Predicated region
    $region14: #{tpu_custom_call.1} parent=1 // pred_check
      _
    $region15: #{tpu_custom_call.1} parent=1 // pred_check_branch
      %68 = sbr.rel (0) target = $region17
    $region16: #{tpu_custom_call.1} parent=1 // pred_region
      %69 = dma.done [#allocation4], 256
    $region17: #{tpu_custom_call.1} parent=1 // pred_fallthru
      _
    %70 = vsyncpa [#allocation3], 1
    %71 = vsyncpa [#allocation4], 1

</llo_original>
